<compile_context>
chip_gen: v7x
topology: tpu7x:2x2x1
jax: 0.10.0
libtpu: 0.0.40
codegen_flags: <defaults>
</compile_context>

<pallas_src>
import functools

import jax
import jax.numpy as jnp
from jax import lax
from jax.experimental import pallas as pl
from jax.experimental.pallas import tpu as pltpu

N_DIMS = 1
H1, H2, H3 = 4, 8, 4

LANE = 256        # lanes per block (multiple of 128)
SUB = 8           # sublane rows per inner sub-chunk
ROWS_MAX = 512    # max rows per block -> 512*256 = 128K elems = 512 KB/block


def _round_up(x, m):
    return ((x + m - 1) // m) * m


def _mlp_kernel(w1_ref, b1_ref, w2_ref, b2_ref, w3_ref, b3_ref, w4_ref, b4_ref,
                x_ref, o_ref):
    # x_ref / o_ref block: (ROW_TILE, LANE) float32, batch packed densely.
    n_sub = x_ref.shape[0] // SUB

    # Hoist all weight / bias scalars out of the inner loop (read once/step).
    w1 = [w1_ref[0, j] for j in range(H1)]
    b1 = [b1_ref[0, j] for j in range(H1)]
    w2 = [[w2_ref[k, j] for j in range(H2)] for k in range(H1)]
    b2 = [b2_ref[0, j] for j in range(H2)]
    w3 = [[w3_ref[k, j] for j in range(H3)] for k in range(H2)]
    b3 = [b3_ref[0, j] for j in range(H3)]
    w4 = [w4_ref[k, 0] for k in range(H3)]
    b4 = b4_ref[0, 0]

    def body(i, carry):
        r = pl.multiple_of(i * SUB, SUB)
        x = x_ref[pl.ds(r, SUB), :]                       # (8, 256) = 2 vregs

        # ---- Linear(1 -> 4) + ReLU --------------------------------------
        h1 = [jnp.maximum(x * w1[j] + b1[j], 0.0) for j in range(H1)]

        # ---- Linear(4 -> 8) + Tanh (unrolled VPU broadcast-FMAs) --------
        h2 = []
        for j in range(H2):
            acc = h1[0] * w2[0][j] + b2[j]
            for k in range(1, H1):
                acc = acc + h1[k] * w2[k][j]
            h2.append(jnp.tanh(acc))

        # ---- Linear(8 -> 4) + Sigmoid (tanh form: no f32 divide) --------
        h3 = []
        for j in range(H3):
            acc = h2[0] * w3[0][j] + b3[j]
            for k in range(1, H2):
                acc = acc + h2[k] * w3[k][j]
            h3.append(0.5 * jnp.tanh(0.5 * acc) + 0.5)

        # ---- Linear(4 -> 1) + Softplus (PyTorch beta=1, threshold=20) ---
        acc = h3[0] * w4[0] + b4
        for k in range(1, H3):
            acc = acc + h3[k] * w4[k]
        sp = jnp.log1p(jnp.exp(jnp.minimum(acc, 20.0)))
        o_ref[pl.ds(r, SUB), :] = jnp.where(acc > 20.0, acc, sp)
        return carry

    lax.fori_loop(0, n_sub, body, 0)


@jax.jit
def neural_net_forward(x, params):
    """x: (B, N_DIMS) float32 -> (B, N_DIMS) float32."""
    B = x.shape[0]

    # Flatten the batch and pack it densely into a 2-D (rows, LANE) layout.
    xf = x.astype(jnp.float32).reshape(-1)                # (B,)  (N_DIMS == 1)
    rows = pl.cdiv(B, LANE)
    row_tile = min(ROWS_MAX, _round_up(rows, SUB))        # adaptive, mult of 8
    rows_pad = pl.cdiv(rows, row_tile) * row_tile
    total = rows_pad * LANE
    if total != B:
        xf = jnp.pad(xf, (0, total - B))
    x2 = xf.reshape(rows_pad, LANE)

    # Weights / biases: tiny scalar tables, whole-array resident in SMEM.
    smem_spec = pl.BlockSpec(memory_space=pltpu.MemorySpace.SMEM)
    # x / out: dense (row_tile, LANE) blocks over the batch grid axis.
    tile_spec = pl.BlockSpec((row_tile, LANE), lambda i: (i, 0))

    out2 = pl.pallas_call(
        _mlp_kernel,
        out_shape=jax.ShapeDtypeStruct((rows_pad, LANE), jnp.float32),
        grid=(rows_pad // row_tile,),
        in_specs=[smem_spec] * 8 + [tile_spec],
        out_specs=tile_spec,
        compiler_params=pltpu.CompilerParams(
            dimension_semantics=("parallel",)),
    )(
        params["w1"], params["b1"],
        params["w2"], params["b2"],
        params["w3"], params["b3"],
        params["w4"], params["b4"],
        x2,
    )
    return out2.reshape(-1)[:B].reshape(B, N_DIMS)


def init_params(key):
    """PyTorch nn.Linear default-style init: U(-1/sqrt(fan_in), 1/sqrt(fan_in)).
    Weights stored (in_features, out_features); biases kept 2-D (1, out)."""
    dims = [(N_DIMS, H1), (H1, H2), (H2, H3), (H3, N_DIMS)]
    params = {}
    keys = jax.random.split(key, 2 * len(dims))
    for i, (fan_in, fan_out) in enumerate(dims):
        bound = 1.0 / (fan_in ** 0.5)
        w = jax.random.uniform(keys[2 * i], (fan_in, fan_out),
                               minval=-bound, maxval=bound, dtype=jnp.float32)
        b = jax.random.uniform(keys[2 * i + 1], (1, fan_out),
                               minval=-bound, maxval=bound, dtype=jnp.float32)
        params[f"w{i + 1}"] = w
        params[f"b{i + 1}"] = b
    return params


def _reference_forward(x, p):
    h = jnp.maximum(x @ p["w1"] + p["b1"], 0.0)
    h = jnp.tanh(h @ p["w2"] + p["b2"])
    h = jax.nn.sigmoid(h @ p["w3"] + p["b3"])
    h = h @ p["w4"] + p["b4"]
    return jax.nn.softplus(h)


if __name__ == "__main__":
    key = jax.random.PRNGKey(0)
    k_param, k_x = jax.random.split(key)

    params = init_params(k_param)
    batch = 8
    x = jax.random.normal(k_x, (batch, N_DIMS), dtype=jnp.float32)

    out = neural_net_forward(x, params)
    out = jax.block_until_ready(out)

    ref = _reference_forward(x, params)
    assert out.shape == (batch, N_DIMS)
    assert jnp.allclose(out, ref, atol=1e-5, rtol=1e-4), (
        f"max abs err = {jnp.max(jnp.abs(out - ref))}")

    print("KERNEL_OK")
</pallas_src>

<mosaic_0001>
module attributes {stable_mosaic.version = 11 : i64} {
  func.func @_mlp_kernel(%arg0: i32, %arg1: memref<1x4xf32, #tpu.memory_space<smem>>, %arg2: memref<1x4xf32, #tpu.memory_space<smem>>, %arg3: memref<4x8xf32, #tpu.memory_space<smem>>, %arg4: memref<1x8xf32, #tpu.memory_space<smem>>, %arg5: memref<8x4xf32, #tpu.memory_space<smem>>, %arg6: memref<1x4xf32, #tpu.memory_space<smem>>, %arg7: memref<4x1xf32, #tpu.memory_space<smem>>, %arg8: memref<1x1xf32, #tpu.memory_space<smem>>, %arg9: memref<8x256xf32, #tpu.memory_space<vmem>>, %arg10: memref<8x256xf32, #tpu.memory_space<vmem>>) attributes {dimension_semantics = [#tpu.dimension_semantics<parallel>], iteration_bounds = array<i64: 1>, scalar_prefetch = 0 : i64, scratch_operands = 0 : i64, tpu.core_type = #tpu.core_type<tc>, window_params = [{transform_indices = @transform_0, window_bounds = array<i64: 1, 4>}, {transform_indices = @transform_1, window_bounds = array<i64: 1, 4>}, {transform_indices = @transform_2, window_bounds = array<i64: 4, 8>}, {transform_indices = @transform_3, window_bounds = array<i64: 1, 8>}, {transform_indices = @transform_4, window_bounds = array<i64: 8, 4>}, {transform_indices = @transform_5, window_bounds = array<i64: 1, 4>}, {transform_indices = @transform_6, window_bounds = array<i64: 4, 1>}, {transform_indices = @transform_7, window_bounds = array<i64: 1, 1>}, {transform_indices = @transform_8, window_bounds = array<i64: 8, 256>}, {transform_indices = @transform_9, window_bounds = array<i64: 8, 256>}]} {
    %c0 = arith.constant 0 : index
    %c0_0 = arith.constant 0 : index
    %0 = memref.load %arg1[%c0, %c0_0] : memref<1x4xf32, #tpu.memory_space<smem>>
    %c0_1 = arith.constant 0 : index
    %c1 = arith.constant 1 : index
    %1 = memref.load %arg1[%c0_1, %c1] : memref<1x4xf32, #tpu.memory_space<smem>>
    %c0_2 = arith.constant 0 : index
    %c2 = arith.constant 2 : index
    %2 = memref.load %arg1[%c0_2, %c2] : memref<1x4xf32, #tpu.memory_space<smem>>
    %c0_3 = arith.constant 0 : index
    %c3 = arith.constant 3 : index
    %3 = memref.load %arg1[%c0_3, %c3] : memref<1x4xf32, #tpu.memory_space<smem>>
    %c0_4 = arith.constant 0 : index
    %c0_5 = arith.constant 0 : index
    %4 = memref.load %arg2[%c0_4, %c0_5] : memref<1x4xf32, #tpu.memory_space<smem>>
    %c0_6 = arith.constant 0 : index
    %c1_7 = arith.constant 1 : index
    %5 = memref.load %arg2[%c0_6, %c1_7] : memref<1x4xf32, #tpu.memory_space<smem>>
    %c0_8 = arith.constant 0 : index
    %c2_9 = arith.constant 2 : index
    %6 = memref.load %arg2[%c0_8, %c2_9] : memref<1x4xf32, #tpu.memory_space<smem>>
    %c0_10 = arith.constant 0 : index
    %c3_11 = arith.constant 3 : index
    %7 = memref.load %arg2[%c0_10, %c3_11] : memref<1x4xf32, #tpu.memory_space<smem>>
    %c0_12 = arith.constant 0 : index
    %c0_13 = arith.constant 0 : index
    %8 = memref.load %arg3[%c0_12, %c0_13] : memref<4x8xf32, #tpu.memory_space<smem>>
    %c0_14 = arith.constant 0 : index
    %c1_15 = arith.constant 1 : index
    %9 = memref.load %arg3[%c0_14, %c1_15] : memref<4x8xf32, #tpu.memory_space<smem>>
    %c0_16 = arith.constant 0 : index
    %c2_17 = arith.constant 2 : index
    %10 = memref.load %arg3[%c0_16, %c2_17] : memref<4x8xf32, #tpu.memory_space<smem>>
    %c0_18 = arith.constant 0 : index
    %c3_19 = arith.constant 3 : index
    %11 = memref.load %arg3[%c0_18, %c3_19] : memref<4x8xf32, #tpu.memory_space<smem>>
    %c0_20 = arith.constant 0 : index
    %c4 = arith.constant 4 : index
    %12 = memref.load %arg3[%c0_20, %c4] : memref<4x8xf32, #tpu.memory_space<smem>>
    %c0_21 = arith.constant 0 : index
    %c5 = arith.constant 5 : index
    %13 = memref.load %arg3[%c0_21, %c5] : memref<4x8xf32, #tpu.memory_space<smem>>
    %c0_22 = arith.constant 0 : index
    %c6 = arith.constant 6 : index
    %14 = memref.load %arg3[%c0_22, %c6] : memref<4x8xf32, #tpu.memory_space<smem>>
    %c0_23 = arith.constant 0 : index
    %c7 = arith.constant 7 : index
    %15 = memref.load %arg3[%c0_23, %c7] : memref<4x8xf32, #tpu.memory_space<smem>>
    %c1_24 = arith.constant 1 : index
    %c0_25 = arith.constant 0 : index
    %16 = memref.load %arg3[%c1_24, %c0_25] : memref<4x8xf32, #tpu.memory_space<smem>>
    %c1_26 = arith.constant 1 : index
    %c1_27 = arith.constant 1 : index
    %17 = memref.load %arg3[%c1_26, %c1_27] : memref<4x8xf32, #tpu.memory_space<smem>>
    %c1_28 = arith.constant 1 : index
    %c2_29 = arith.constant 2 : index
    %18 = memref.load %arg3[%c1_28, %c2_29] : memref<4x8xf32, #tpu.memory_space<smem>>
    %c1_30 = arith.constant 1 : index
    %c3_31 = arith.constant 3 : index
    %19 = memref.load %arg3[%c1_30, %c3_31] : memref<4x8xf32, #tpu.memory_space<smem>>
    %c1_32 = arith.constant 1 : index
    %c4_33 = arith.constant 4 : index
    %20 = memref.load %arg3[%c1_32, %c4_33] : memref<4x8xf32, #tpu.memory_space<smem>>
    %c1_34 = arith.constant 1 : index
    %c5_35 = arith.constant 5 : index
    %21 = memref.load %arg3[%c1_34, %c5_35] : memref<4x8xf32, #tpu.memory_space<smem>>
    %c1_36 = arith.constant 1 : index
    %c6_37 = arith.constant 6 : index
    %22 = memref.load %arg3[%c1_36, %c6_37] : memref<4x8xf32, #tpu.memory_space<smem>>
    %c1_38 = arith.constant 1 : index
    %c7_39 = arith.constant 7 : index
    %23 = memref.load %arg3[%c1_38, %c7_39] : memref<4x8xf32, #tpu.memory_space<smem>>
    %c2_40 = arith.constant 2 : index
    %c0_41 = arith.constant 0 : index
    %24 = memref.load %arg3[%c2_40, %c0_41] : memref<4x8xf32, #tpu.memory_space<smem>>
    %c2_42 = arith.constant 2 : index
    %c1_43 = arith.constant 1 : index
    %25 = memref.load %arg3[%c2_42, %c1_43] : memref<4x8xf32, #tpu.memory_space<smem>>
    %c2_44 = arith.constant 2 : index
    %c2_45 = arith.constant 2 : index
    %26 = memref.load %arg3[%c2_44, %c2_45] : memref<4x8xf32, #tpu.memory_space<smem>>
    %c2_46 = arith.constant 2 : index
    %c3_47 = arith.constant 3 : index
    %27 = memref.load %arg3[%c2_46, %c3_47] : memref<4x8xf32, #tpu.memory_space<smem>>
    %c2_48 = arith.constant 2 : index
    %c4_49 = arith.constant 4 : index
    %28 = memref.load %arg3[%c2_48, %c4_49] : memref<4x8xf32, #tpu.memory_space<smem>>
    %c2_50 = arith.constant 2 : index
    %c5_51 = arith.constant 5 : index
    %29 = memref.load %arg3[%c2_50, %c5_51] : memref<4x8xf32, #tpu.memory_space<smem>>
    %c2_52 = arith.constant 2 : index
    %c6_53 = arith.constant 6 : index
    %30 = memref.load %arg3[%c2_52, %c6_53] : memref<4x8xf32, #tpu.memory_space<smem>>
    %c2_54 = arith.constant 2 : index
    %c7_55 = arith.constant 7 : index
    %31 = memref.load %arg3[%c2_54, %c7_55] : memref<4x8xf32, #tpu.memory_space<smem>>
    %c3_56 = arith.constant 3 : index
    %c0_57 = arith.constant 0 : index
    %32 = memref.load %arg3[%c3_56, %c0_57] : memref<4x8xf32, #tpu.memory_space<smem>>
    %c3_58 = arith.constant 3 : index
    %c1_59 = arith.constant 1 : index
    %33 = memref.load %arg3[%c3_58, %c1_59] : memref<4x8xf32, #tpu.memory_space<smem>>
    %c3_60 = arith.constant 3 : index
    %c2_61 = arith.constant 2 : index
    %34 = memref.load %arg3[%c3_60, %c2_61] : memref<4x8xf32, #tpu.memory_space<smem>>
    %c3_62 = arith.constant 3 : index
    %c3_63 = arith.constant 3 : index
    %35 = memref.load %arg3[%c3_62, %c3_63] : memref<4x8xf32, #tpu.memory_space<smem>>
    %c3_64 = arith.constant 3 : index
    %c4_65 = arith.constant 4 : index
    %36 = memref.load %arg3[%c3_64, %c4_65] : memref<4x8xf32, #tpu.memory_space<smem>>
    %c3_66 = arith.constant 3 : index
    %c5_67 = arith.constant 5 : index
    %37 = memref.load %arg3[%c3_66, %c5_67] : memref<4x8xf32, #tpu.memory_space<smem>>
    %c3_68 = arith.constant 3 : index
    %c6_69 = arith.constant 6 : index
    %38 = memref.load %arg3[%c3_68, %c6_69] : memref<4x8xf32, #tpu.memory_space<smem>>
    %c3_70 = arith.constant 3 : index
    %c7_71 = arith.constant 7 : index
    %39 = memref.load %arg3[%c3_70, %c7_71] : memref<4x8xf32, #tpu.memory_space<smem>>
    %c0_72 = arith.constant 0 : index
    %c0_73 = arith.constant 0 : index
    %40 = memref.load %arg4[%c0_72, %c0_73] : memref<1x8xf32, #tpu.memory_space<smem>>
    %c0_74 = arith.constant 0 : index
    %c1_75 = arith.constant 1 : index
    %41 = memref.load %arg4[%c0_74, %c1_75] : memref<1x8xf32, #tpu.memory_space<smem>>
    %c0_76 = arith.constant 0 : index
    %c2_77 = arith.constant 2 : index
    %42 = memref.load %arg4[%c0_76, %c2_77] : memref<1x8xf32, #tpu.memory_space<smem>>
    %c0_78 = arith.constant 0 : index
    %c3_79 = arith.constant 3 : index
    %43 = memref.load %arg4[%c0_78, %c3_79] : memref<1x8xf32, #tpu.memory_space<smem>>
    %c0_80 = arith.constant 0 : index
    %c4_81 = arith.constant 4 : index
    %44 = memref.load %arg4[%c0_80, %c4_81] : memref<1x8xf32, #tpu.memory_space<smem>>
    %c0_82 = arith.constant 0 : index
    %c5_83 = arith.constant 5 : index
    %45 = memref.load %arg4[%c0_82, %c5_83] : memref<1x8xf32, #tpu.memory_space<smem>>
    %c0_84 = arith.constant 0 : index
    %c6_85 = arith.constant 6 : index
    %46 = memref.load %arg4[%c0_84, %c6_85] : memref<1x8xf32, #tpu.memory_space<smem>>
    %c0_86 = arith.constant 0 : index
    %c7_87 = arith.constant 7 : index
    %47 = memref.load %arg4[%c0_86, %c7_87] : memref<1x8xf32, #tpu.memory_space<smem>>
    %c0_88 = arith.constant 0 : index
    %c0_89 = arith.constant 0 : index
    %48 = memref.load %arg5[%c0_88, %c0_89] : memref<8x4xf32, #tpu.memory_space<smem>>
    %c0_90 = arith.constant 0 : index
    %c1_91 = arith.constant 1 : index
    %49 = memref.load %arg5[%c0_90, %c1_91] : memref<8x4xf32, #tpu.memory_space<smem>>
    %c0_92 = arith.constant 0 : index
    %c2_93 = arith.constant 2 : index
    %50 = memref.load %arg5[%c0_92, %c2_93] : memref<8x4xf32, #tpu.memory_space<smem>>
    %c0_94 = arith.constant 0 : index
    %c3_95 = arith.constant 3 : index
    %51 = memref.load %arg5[%c0_94, %c3_95] : memref<8x4xf32, #tpu.memory_space<smem>>
    %c1_96 = arith.constant 1 : index
    %c0_97 = arith.constant 0 : index
    %52 = memref.load %arg5[%c1_96, %c0_97] : memref<8x4xf32, #tpu.memory_space<smem>>
    %c1_98 = arith.constant 1 : index
    %c1_99 = arith.constant 1 : index
    %53 = memref.load %arg5[%c1_98, %c1_99] : memref<8x4xf32, #tpu.memory_space<smem>>
    %c1_100 = arith.constant 1 : index
    %c2_101 = arith.constant 2 : index
    %54 = memref.load %arg5[%c1_100, %c2_101] : memref<8x4xf32, #tpu.memory_space<smem>>
    %c1_102 = arith.constant 1 : index
    %c3_103 = arith.constant 3 : index
    %55 = memref.load %arg5[%c1_102, %c3_103] : memref<8x4xf32, #tpu.memory_space<smem>>
    %c2_104 = arith.constant 2 : index
    %c0_105 = arith.constant 0 : index
    %56 = memref.load %arg5[%c2_104, %c0_105] : memref<8x4xf32, #tpu.memory_space<smem>>
    %c2_106 = arith.constant 2 : index
    %c1_107 = arith.constant 1 : index
    %57 = memref.load %arg5[%c2_106, %c1_107] : memref<8x4xf32, #tpu.memory_space<smem>>
    %c2_108 = arith.constant 2 : index
    %c2_109 = arith.constant 2 : index
    %58 = memref.load %arg5[%c2_108, %c2_109] : memref<8x4xf32, #tpu.memory_space<smem>>
    %c2_110 = arith.constant 2 : index
    %c3_111 = arith.constant 3 : index
    %59 = memref.load %arg5[%c2_110, %c3_111] : memref<8x4xf32, #tpu.memory_space<smem>>
    %c3_112 = arith.constant 3 : index
    %c0_113 = arith.constant 0 : index
    %60 = memref.load %arg5[%c3_112, %c0_113] : memref<8x4xf32, #tpu.memory_space<smem>>
    %c3_114 = arith.constant 3 : index
    %c1_115 = arith.constant 1 : index
    %61 = memref.load %arg5[%c3_114, %c1_115] : memref<8x4xf32, #tpu.memory_space<smem>>
    %c3_116 = arith.constant 3 : index
    %c2_117 = arith.constant 2 : index
    %62 = memref.load %arg5[%c3_116, %c2_117] : memref<8x4xf32, #tpu.memory_space<smem>>
    %c3_118 = arith.constant 3 : index
    %c3_119 = arith.constant 3 : index
    %63 = memref.load %arg5[%c3_118, %c3_119] : memref<8x4xf32, #tpu.memory_space<smem>>
    %c4_120 = arith.constant 4 : index
    %c0_121 = arith.constant 0 : index
    %64 = memref.load %arg5[%c4_120, %c0_121] : memref<8x4xf32, #tpu.memory_space<smem>>
    %c4_122 = arith.constant 4 : index
    %c1_123 = arith.constant 1 : index
    %65 = memref.load %arg5[%c4_122, %c1_123] : memref<8x4xf32, #tpu.memory_space<smem>>
    %c4_124 = arith.constant 4 : index
    %c2_125 = arith.constant 2 : index
    %66 = memref.load %arg5[%c4_124, %c2_125] : memref<8x4xf32, #tpu.memory_space<smem>>
    %c4_126 = arith.constant 4 : index
    %c3_127 = arith.constant 3 : index
    %67 = memref.load %arg5[%c4_126, %c3_127] : memref<8x4xf32, #tpu.memory_space<smem>>
    %c5_128 = arith.constant 5 : index
    %c0_129 = arith.constant 0 : index
    %68 = memref.load %arg5[%c5_128, %c0_129] : memref<8x4xf32, #tpu.memory_space<smem>>
    %c5_130 = arith.constant 5 : index
    %c1_131 = arith.constant 1 : index
    %69 = memref.load %arg5[%c5_130, %c1_131] : memref<8x4xf32, #tpu.memory_space<smem>>
    %c5_132 = arith.constant 5 : index
    %c2_133 = arith.constant 2 : index
    %70 = memref.load %arg5[%c5_132, %c2_133] : memref<8x4xf32, #tpu.memory_space<smem>>
    %c5_134 = arith.constant 5 : index
    %c3_135 = arith.constant 3 : index
    %71 = memref.load %arg5[%c5_134, %c3_135] : memref<8x4xf32, #tpu.memory_space<smem>>
    %c6_136 = arith.constant 6 : index
    %c0_137 = arith.constant 0 : index
    %72 = memref.load %arg5[%c6_136, %c0_137] : memref<8x4xf32, #tpu.memory_space<smem>>
    %c6_138 = arith.constant 6 : index
    %c1_139 = arith.constant 1 : index
    %73 = memref.load %arg5[%c6_138, %c1_139] : memref<8x4xf32, #tpu.memory_space<smem>>
    %c6_140 = arith.constant 6 : index
    %c2_141 = arith.constant 2 : index
    %74 = memref.load %arg5[%c6_140, %c2_141] : memref<8x4xf32, #tpu.memory_space<smem>>
    %c6_142 = arith.constant 6 : index
    %c3_143 = arith.constant 3 : index
    %75 = memref.load %arg5[%c6_142, %c3_143] : memref<8x4xf32, #tpu.memory_space<smem>>
    %c7_144 = arith.constant 7 : index
    %c0_145 = arith.constant 0 : index
    %76 = memref.load %arg5[%c7_144, %c0_145] : memref<8x4xf32, #tpu.memory_space<smem>>
    %c7_146 = arith.constant 7 : index
    %c1_147 = arith.constant 1 : index
    %77 = memref.load %arg5[%c7_146, %c1_147] : memref<8x4xf32, #tpu.memory_space<smem>>
    %c7_148 = arith.constant 7 : index
    %c2_149 = arith.constant 2 : index
    %78 = memref.load %arg5[%c7_148, %c2_149] : memref<8x4xf32, #tpu.memory_space<smem>>
    %c7_150 = arith.constant 7 : index
    %c3_151 = arith.constant 3 : index
    %79 = memref.load %arg5[%c7_150, %c3_151] : memref<8x4xf32, #tpu.memory_space<smem>>
    %c0_152 = arith.constant 0 : index
    %c0_153 = arith.constant 0 : index
    %80 = memref.load %arg6[%c0_152, %c0_153] : memref<1x4xf32, #tpu.memory_space<smem>>
    %c0_154 = arith.constant 0 : index
    %c1_155 = arith.constant 1 : index
    %81 = memref.load %arg6[%c0_154, %c1_155] : memref<1x4xf32, #tpu.memory_space<smem>>
    %c0_156 = arith.constant 0 : index
    %c2_157 = arith.constant 2 : index
    %82 = memref.load %arg6[%c0_156, %c2_157] : memref<1x4xf32, #tpu.memory_space<smem>>
    %c0_158 = arith.constant 0 : index
    %c3_159 = arith.constant 3 : index
    %83 = memref.load %arg6[%c0_158, %c3_159] : memref<1x4xf32, #tpu.memory_space<smem>>
    %c0_160 = arith.constant 0 : index
    %c0_161 = arith.constant 0 : index
    %84 = memref.load %arg7[%c0_160, %c0_161] : memref<4x1xf32, #tpu.memory_space<smem>>
    %c1_162 = arith.constant 1 : index
    %c0_163 = arith.constant 0 : index
    %85 = memref.load %arg7[%c1_162, %c0_163] : memref<4x1xf32, #tpu.memory_space<smem>>
    %c2_164 = arith.constant 2 : index
    %c0_165 = arith.constant 0 : index
    %86 = memref.load %arg7[%c2_164, %c0_165] : memref<4x1xf32, #tpu.memory_space<smem>>
    %c3_166 = arith.constant 3 : index
    %c0_167 = arith.constant 0 : index
    %87 = memref.load %arg7[%c3_166, %c0_167] : memref<4x1xf32, #tpu.memory_space<smem>>
    %c0_168 = arith.constant 0 : index
    %c0_169 = arith.constant 0 : index
    %88 = memref.load %arg8[%c0_168, %c0_169] : memref<1x1xf32, #tpu.memory_space<smem>>
    %c0_i32 = arith.constant 0 : i32
    %c8_i32 = arith.constant 8 : i32
    %89 = arith.muli %c0_i32, %c8_i32 : i32
    %90 = tpu.assume_multiple %89, 8 : i32
    %91 = arith.index_cast %90 : i32 to index
    %c0_170 = arith.constant 0 : index
    %92 = vector.load %arg9[%91, %c0_170] : memref<8x256xf32, #tpu.memory_space<vmem>>, vector<8x256xf32>
    %93 = vector.broadcast %0 : f32 to vector<8x256xf32>
    %94 = arith.mulf %92, %93 : vector<8x256xf32>
    %95 = vector.broadcast %4 : f32 to vector<8x256xf32>
    %96 = arith.addf %94, %95 : vector<8x256xf32>
    %cst = arith.constant 0.000000e+00 : f32
    %97 = vector.broadcast %cst : f32 to vector<8x256xf32>
    %98 = arith.maximumf %96, %97 : vector<8x256xf32>
    %99 = vector.broadcast %1 : f32 to vector<8x256xf32>
    %100 = arith.mulf %92, %99 : vector<8x256xf32>
    %101 = vector.broadcast %5 : f32 to vector<8x256xf32>
    %102 = arith.addf %100, %101 : vector<8x256xf32>
    %cst_171 = arith.constant 0.000000e+00 : f32
    %103 = vector.broadcast %cst_171 : f32 to vector<8x256xf32>
    %104 = arith.maximumf %102, %103 : vector<8x256xf32>
    %105 = vector.broadcast %2 : f32 to vector<8x256xf32>
    %106 = arith.mulf %92, %105 : vector<8x256xf32>
    %107 = vector.broadcast %6 : f32 to vector<8x256xf32>
    %108 = arith.addf %106, %107 : vector<8x256xf32>
    %cst_172 = arith.constant 0.000000e+00 : f32
    %109 = vector.broadcast %cst_172 : f32 to vector<8x256xf32>
    %110 = arith.maximumf %108, %109 : vector<8x256xf32>
    %111 = vector.broadcast %3 : f32 to vector<8x256xf32>
    %112 = arith.mulf %92, %111 : vector<8x256xf32>
    %113 = vector.broadcast %7 : f32 to vector<8x256xf32>
    %114 = arith.addf %112, %113 : vector<8x256xf32>
    %cst_173 = arith.constant 0.000000e+00 : f32
    %115 = vector.broadcast %cst_173 : f32 to vector<8x256xf32>
    %116 = arith.maximumf %114, %115 : vector<8x256xf32>
    %117 = vector.broadcast %8 : f32 to vector<8x256xf32>
    %118 = arith.mulf %98, %117 : vector<8x256xf32>
    %119 = vector.broadcast %40 : f32 to vector<8x256xf32>
    %120 = arith.addf %118, %119 : vector<8x256xf32>
    %121 = vector.broadcast %16 : f32 to vector<8x256xf32>
    %122 = arith.mulf %104, %121 : vector<8x256xf32>
    %123 = arith.addf %120, %122 : vector<8x256xf32>
    %124 = vector.broadcast %24 : f32 to vector<8x256xf32>
    %125 = arith.mulf %110, %124 : vector<8x256xf32>
    %126 = arith.addf %123, %125 : vector<8x256xf32>
    %127 = vector.broadcast %32 : f32 to vector<8x256xf32>
    %128 = arith.mulf %116, %127 : vector<8x256xf32>
    %129 = arith.addf %126, %128 : vector<8x256xf32>
    %130 = math.tanh %129 : vector<8x256xf32>
    %131 = vector.broadcast %9 : f32 to vector<8x256xf32>
    %132 = arith.mulf %98, %131 : vector<8x256xf32>
    %133 = vector.broadcast %41 : f32 to vector<8x256xf32>
    %134 = arith.addf %132, %133 : vector<8x256xf32>
    %135 = vector.broadcast %17 : f32 to vector<8x256xf32>
    %136 = arith.mulf %104, %135 : vector<8x256xf32>
    %137 = arith.addf %134, %136 : vector<8x256xf32>
    %138 = vector.broadcast %25 : f32 to vector<8x256xf32>
    %139 = arith.mulf %110, %138 : vector<8x256xf32>
    %140 = arith.addf %137, %139 : vector<8x256xf32>
    %141 = vector.broadcast %33 : f32 to vector<8x256xf32>
    %142 = arith.mulf %116, %141 : vector<8x256xf32>
    %143 = arith.addf %140, %142 : vector<8x256xf32>
    %144 = math.tanh %143 : vector<8x256xf32>
    %145 = vector.broadcast %10 : f32 to vector<8x256xf32>
    %146 = arith.mulf %98, %145 : vector<8x256xf32>
    %147 = vector.broadcast %42 : f32 to vector<8x256xf32>
    %148 = arith.addf %146, %147 : vector<8x256xf32>
    %149 = vector.broadcast %18 : f32 to vector<8x256xf32>
    %150 = arith.mulf %104, %149 : vector<8x256xf32>
    %151 = arith.addf %148, %150 : vector<8x256xf32>
    %152 = vector.broadcast %26 : f32 to vector<8x256xf32>
    %153 = arith.mulf %110, %152 : vector<8x256xf32>
    %154 = arith.addf %151, %153 : vector<8x256xf32>
    %155 = vector.broadcast %34 : f32 to vector<8x256xf32>
    %156 = arith.mulf %116, %155 : vector<8x256xf32>
    %157 = arith.addf %154, %156 : vector<8x256xf32>
    %158 = math.tanh %157 : vector<8x256xf32>
    %159 = vector.broadcast %11 : f32 to vector<8x256xf32>
    %160 = arith.mulf %98, %159 : vector<8x256xf32>
    %161 = vector.broadcast %43 : f32 to vector<8x256xf32>
    %162 = arith.addf %160, %161 : vector<8x256xf32>
    %163 = vector.broadcast %19 : f32 to vector<8x256xf32>
    %164 = arith.mulf %104, %163 : vector<8x256xf32>
    %165 = arith.addf %162, %164 : vector<8x256xf32>
    %166 = vector.broadcast %27 : f32 to vector<8x256xf32>
    %167 = arith.mulf %110, %166 : vector<8x256xf32>
    %168 = arith.addf %165, %167 : vector<8x256xf32>
    %169 = vector.broadcast %35 : f32 to vector<8x256xf32>
    %170 = arith.mulf %116, %169 : vector<8x256xf32>
    %171 = arith.addf %168, %170 : vector<8x256xf32>
    %172 = math.tanh %171 : vector<8x256xf32>
    %173 = vector.broadcast %12 : f32 to vector<8x256xf32>
    %174 = arith.mulf %98, %173 : vector<8x256xf32>
    %175 = vector.broadcast %44 : f32 to vector<8x256xf32>
    %176 = arith.addf %174, %175 : vector<8x256xf32>
    %177 = vector.broadcast %20 : f32 to vector<8x256xf32>
    %178 = arith.mulf %104, %177 : vector<8x256xf32>
    %179 = arith.addf %176, %178 : vector<8x256xf32>
    %180 = vector.broadcast %28 : f32 to vector<8x256xf32>
    %181 = arith.mulf %110, %180 : vector<8x256xf32>
    %182 = arith.addf %179, %181 : vector<8x256xf32>
    %183 = vector.broadcast %36 : f32 to vector<8x256xf32>
    %184 = arith.mulf %116, %183 : vector<8x256xf32>
    %185 = arith.addf %182, %184 : vector<8x256xf32>
    %186 = math.tanh %185 : vector<8x256xf32>
    %187 = vector.broadcast %13 : f32 to vector<8x256xf32>
    %188 = arith.mulf %98, %187 : vector<8x256xf32>
    %189 = vector.broadcast %45 : f32 to vector<8x256xf32>
    %190 = arith.addf %188, %189 : vector<8x256xf32>
    %191 = vector.broadcast %21 : f32 to vector<8x256xf32>
    %192 = arith.mulf %104, %191 : vector<8x256xf32>
    %193 = arith.addf %190, %192 : vector<8x256xf32>
    %194 = vector.broadcast %29 : f32 to vector<8x256xf32>
    %195 = arith.mulf %110, %194 : vector<8x256xf32>
    %196 = arith.addf %193, %195 : vector<8x256xf32>
    %197 = vector.broadcast %37 : f32 to vector<8x256xf32>
    %198 = arith.mulf %116, %197 : vector<8x256xf32>
    %199 = arith.addf %196, %198 : vector<8x256xf32>
    %200 = math.tanh %199 : vector<8x256xf32>
    %201 = vector.broadcast %14 : f32 to vector<8x256xf32>
    %202 = arith.mulf %98, %201 : vector<8x256xf32>
    %203 = vector.broadcast %46 : f32 to vector<8x256xf32>
    %204 = arith.addf %202, %203 : vector<8x256xf32>
    %205 = vector.broadcast %22 : f32 to vector<8x256xf32>
    %206 = arith.mulf %104, %205 : vector<8x256xf32>
    %207 = arith.addf %204, %206 : vector<8x256xf32>
    %208 = vector.broadcast %30 : f32 to vector<8x256xf32>
    %209 = arith.mulf %110, %208 : vector<8x256xf32>
    %210 = arith.addf %207, %209 : vector<8x256xf32>
    %211 = vector.broadcast %38 : f32 to vector<8x256xf32>
    %212 = arith.mulf %116, %211 : vector<8x256xf32>
    %213 = arith.addf %210, %212 : vector<8x256xf32>
    %214 = math.tanh %213 : vector<8x256xf32>
    %215 = vector.broadcast %15 : f32 to vector<8x256xf32>
    %216 = arith.mulf %98, %215 : vector<8x256xf32>
    %217 = vector.broadcast %47 : f32 to vector<8x256xf32>
    %218 = arith.addf %216, %217 : vector<8x256xf32>
    %219 = vector.broadcast %23 : f32 to vector<8x256xf32>
    %220 = arith.mulf %104, %219 : vector<8x256xf32>
    %221 = arith.addf %218, %220 : vector<8x256xf32>
    %222 = vector.broadcast %31 : f32 to vector<8x256xf32>
    %223 = arith.mulf %110, %222 : vector<8x256xf32>
    %224 = arith.addf %221, %223 : vector<8x256xf32>
    %225 = vector.broadcast %39 : f32 to vector<8x256xf32>
    %226 = arith.mulf %116, %225 : vector<8x256xf32>
    %227 = arith.addf %224, %226 : vector<8x256xf32>
    %228 = math.tanh %227 : vector<8x256xf32>
    %229 = vector.broadcast %48 : f32 to vector<8x256xf32>
    %230 = arith.mulf %130, %229 : vector<8x256xf32>
    %231 = vector.broadcast %80 : f32 to vector<8x256xf32>
    %232 = arith.addf %230, %231 : vector<8x256xf32>
    %233 = vector.broadcast %52 : f32 to vector<8x256xf32>
    %234 = arith.mulf %144, %233 : vector<8x256xf32>
    %235 = arith.addf %232, %234 : vector<8x256xf32>
    %236 = vector.broadcast %56 : f32 to vector<8x256xf32>
    %237 = arith.mulf %158, %236 : vector<8x256xf32>
    %238 = arith.addf %235, %237 : vector<8x256xf32>
    %239 = vector.broadcast %60 : f32 to vector<8x256xf32>
    %240 = arith.mulf %172, %239 : vector<8x256xf32>
    %241 = arith.addf %238, %240 : vector<8x256xf32>
    %242 = vector.broadcast %64 : f32 to vector<8x256xf32>
    %243 = arith.mulf %186, %242 : vector<8x256xf32>
    %244 = arith.addf %241, %243 : vector<8x256xf32>
    %245 = vector.broadcast %68 : f32 to vector<8x256xf32>
    %246 = arith.mulf %200, %245 : vector<8x256xf32>
    %247 = arith.addf %244, %246 : vector<8x256xf32>
    %248 = vector.broadcast %72 : f32 to vector<8x256xf32>
    %249 = arith.mulf %214, %248 : vector<8x256xf32>
    %250 = arith.addf %247, %249 : vector<8x256xf32>
    %251 = vector.broadcast %76 : f32 to vector<8x256xf32>
    %252 = arith.mulf %228, %251 : vector<8x256xf32>
    %253 = arith.addf %250, %252 : vector<8x256xf32>
    %cst_174 = arith.constant 5.000000e-01 : f32
    %254 = vector.broadcast %cst_174 : f32 to vector<8x256xf32>
    %255 = arith.mulf %254, %253 : vector<8x256xf32>
    %256 = math.tanh %255 : vector<8x256xf32>
    %cst_175 = arith.constant 5.000000e-01 : f32
    %257 = vector.broadcast %cst_175 : f32 to vector<8x256xf32>
    %258 = arith.mulf %257, %256 : vector<8x256xf32>
    %cst_176 = arith.constant 5.000000e-01 : f32
    %259 = vector.broadcast %cst_176 : f32 to vector<8x256xf32>
    %260 = arith.addf %258, %259 : vector<8x256xf32>
    %261 = vector.broadcast %49 : f32 to vector<8x256xf32>
    %262 = arith.mulf %130, %261 : vector<8x256xf32>
    %263 = vector.broadcast %81 : f32 to vector<8x256xf32>
    %264 = arith.addf %262, %263 : vector<8x256xf32>
    %265 = vector.broadcast %53 : f32 to vector<8x256xf32>
    %266 = arith.mulf %144, %265 : vector<8x256xf32>
    %267 = arith.addf %264, %266 : vector<8x256xf32>
    %268 = vector.broadcast %57 : f32 to vector<8x256xf32>
    %269 = arith.mulf %158, %268 : vector<8x256xf32>
    %270 = arith.addf %267, %269 : vector<8x256xf32>
    %271 = vector.broadcast %61 : f32 to vector<8x256xf32>
    %272 = arith.mulf %172, %271 : vector<8x256xf32>
    %273 = arith.addf %270, %272 : vector<8x256xf32>
    %274 = vector.broadcast %65 : f32 to vector<8x256xf32>
    %275 = arith.mulf %186, %274 : vector<8x256xf32>
    %276 = arith.addf %273, %275 : vector<8x256xf32>
    %277 = vector.broadcast %69 : f32 to vector<8x256xf32>
    %278 = arith.mulf %200, %277 : vector<8x256xf32>
    %279 = arith.addf %276, %278 : vector<8x256xf32>
    %280 = vector.broadcast %73 : f32 to vector<8x256xf32>
    %281 = arith.mulf %214, %280 : vector<8x256xf32>
    %282 = arith.addf %279, %281 : vector<8x256xf32>
    %283 = vector.broadcast %77 : f32 to vector<8x256xf32>
    %284 = arith.mulf %228, %283 : vector<8x256xf32>
    %285 = arith.addf %282, %284 : vector<8x256xf32>
    %cst_177 = arith.constant 5.000000e-01 : f32
    %286 = vector.broadcast %cst_177 : f32 to vector<8x256xf32>
    %287 = arith.mulf %286, %285 : vector<8x256xf32>
    %288 = math.tanh %287 : vector<8x256xf32>
    %cst_178 = arith.constant 5.000000e-01 : f32
    %289 = vector.broadcast %cst_178 : f32 to vector<8x256xf32>
    %290 = arith.mulf %289, %288 : vector<8x256xf32>
    %cst_179 = arith.constant 5.000000e-01 : f32
    %291 = vector.broadcast %cst_179 : f32 to vector<8x256xf32>
    %292 = arith.addf %290, %291 : vector<8x256xf32>
    %293 = vector.broadcast %50 : f32 to vector<8x256xf32>
    %294 = arith.mulf %130, %293 : vector<8x256xf32>
    %295 = vector.broadcast %82 : f32 to vector<8x256xf32>
    %296 = arith.addf %294, %295 : vector<8x256xf32>
    %297 = vector.broadcast %54 : f32 to vector<8x256xf32>
    %298 = arith.mulf %144, %297 : vector<8x256xf32>
    %299 = arith.addf %296, %298 : vector<8x256xf32>
    %300 = vector.broadcast %58 : f32 to vector<8x256xf32>
    %301 = arith.mulf %158, %300 : vector<8x256xf32>
    %302 = arith.addf %299, %301 : vector<8x256xf32>
    %303 = vector.broadcast %62 : f32 to vector<8x256xf32>
    %304 = arith.mulf %172, %303 : vector<8x256xf32>
    %305 = arith.addf %302, %304 : vector<8x256xf32>
    %306 = vector.broadcast %66 : f32 to vector<8x256xf32>
    %307 = arith.mulf %186, %306 : vector<8x256xf32>
    %308 = arith.addf %305, %307 : vector<8x256xf32>
    %309 = vector.broadcast %70 : f32 to vector<8x256xf32>
    %310 = arith.mulf %200, %309 : vector<8x256xf32>
    %311 = arith.addf %308, %310 : vector<8x256xf32>
    %312 = vector.broadcast %74 : f32 to vector<8x256xf32>
    %313 = arith.mulf %214, %312 : vector<8x256xf32>
    %314 = arith.addf %311, %313 : vector<8x256xf32>
    %315 = vector.broadcast %78 : f32 to vector<8x256xf32>
    %316 = arith.mulf %228, %315 : vector<8x256xf32>
    %317 = arith.addf %314, %316 : vector<8x256xf32>
    %cst_180 = arith.constant 5.000000e-01 : f32
    %318 = vector.broadcast %cst_180 : f32 to vector<8x256xf32>
    %319 = arith.mulf %318, %317 : vector<8x256xf32>
    %320 = math.tanh %319 : vector<8x256xf32>
    %cst_181 = arith.constant 5.000000e-01 : f32
    %321 = vector.broadcast %cst_181 : f32 to vector<8x256xf32>
    %322 = arith.mulf %321, %320 : vector<8x256xf32>
    %cst_182 = arith.constant 5.000000e-01 : f32
    %323 = vector.broadcast %cst_182 : f32 to vector<8x256xf32>
    %324 = arith.addf %322, %323 : vector<8x256xf32>
    %325 = vector.broadcast %51 : f32 to vector<8x256xf32>
    %326 = arith.mulf %130, %325 : vector<8x256xf32>
    %327 = vector.broadcast %83 : f32 to vector<8x256xf32>
    %328 = arith.addf %326, %327 : vector<8x256xf32>
    %329 = vector.broadcast %55 : f32 to vector<8x256xf32>
    %330 = arith.mulf %144, %329 : vector<8x256xf32>
    %331 = arith.addf %328, %330 : vector<8x256xf32>
    %332 = vector.broadcast %59 : f32 to vector<8x256xf32>
    %333 = arith.mulf %158, %332 : vector<8x256xf32>
    %334 = arith.addf %331, %333 : vector<8x256xf32>
    %335 = vector.broadcast %63 : f32 to vector<8x256xf32>
    %336 = arith.mulf %172, %335 : vector<8x256xf32>
    %337 = arith.addf %334, %336 : vector<8x256xf32>
    %338 = vector.broadcast %67 : f32 to vector<8x256xf32>
    %339 = arith.mulf %186, %338 : vector<8x256xf32>
    %340 = arith.addf %337, %339 : vector<8x256xf32>
    %341 = vector.broadcast %71 : f32 to vector<8x256xf32>
    %342 = arith.mulf %200, %341 : vector<8x256xf32>
    %343 = arith.addf %340, %342 : vector<8x256xf32>
    %344 = vector.broadcast %75 : f32 to vector<8x256xf32>
    %345 = arith.mulf %214, %344 : vector<8x256xf32>
    %346 = arith.addf %343, %345 : vector<8x256xf32>
    %347 = vector.broadcast %79 : f32 to vector<8x256xf32>
    %348 = arith.mulf %228, %347 : vector<8x256xf32>
    %349 = arith.addf %346, %348 : vector<8x256xf32>
    %cst_183 = arith.constant 5.000000e-01 : f32
    %350 = vector.broadcast %cst_183 : f32 to vector<8x256xf32>
    %351 = arith.mulf %350, %349 : vector<8x256xf32>
    %352 = math.tanh %351 : vector<8x256xf32>
    %cst_184 = arith.constant 5.000000e-01 : f32
    %353 = vector.broadcast %cst_184 : f32 to vector<8x256xf32>
    %354 = arith.mulf %353, %352 : vector<8x256xf32>
    %cst_185 = arith.constant 5.000000e-01 : f32
    %355 = vector.broadcast %cst_185 : f32 to vector<8x256xf32>
    %356 = arith.addf %354, %355 : vector<8x256xf32>
    %357 = vector.broadcast %84 : f32 to vector<8x256xf32>
    %358 = arith.mulf %260, %357 : vector<8x256xf32>
    %359 = vector.broadcast %88 : f32 to vector<8x256xf32>
    %360 = arith.addf %358, %359 : vector<8x256xf32>
    %361 = vector.broadcast %85 : f32 to vector<8x256xf32>
    %362 = arith.mulf %292, %361 : vector<8x256xf32>
    %363 = arith.addf %360, %362 : vector<8x256xf32>
    %364 = vector.broadcast %86 : f32 to vector<8x256xf32>
    %365 = arith.mulf %324, %364 : vector<8x256xf32>
    %366 = arith.addf %363, %365 : vector<8x256xf32>
    %367 = vector.broadcast %87 : f32 to vector<8x256xf32>
    %368 = arith.mulf %356, %367 : vector<8x256xf32>
    %369 = arith.addf %366, %368 : vector<8x256xf32>
    %cst_186 = arith.constant 2.000000e+01 : f32
    %370 = vector.broadcast %cst_186 : f32 to vector<8x256xf32>
    %371 = arith.minimumf %369, %370 : vector<8x256xf32>
    %372 = math.exp %371 : vector<8x256xf32>
    %373 = math.log1p %372 : vector<8x256xf32>
    %cst_187 = arith.constant 2.000000e+01 : f32
    %374 = vector.broadcast %cst_187 : f32 to vector<8x256xf32>
    %375 = arith.cmpf ogt, %369, %374 : vector<8x256xf32>
    %376 = arith.select %375, %369, %373 : vector<8x256xi1>, vector<8x256xf32>
    %377 = arith.index_cast %90 : i32 to index
    %c0_188 = arith.constant 0 : index
    %378 = vector.load %arg10[%377, %c0_188] : memref<8x256xf32, #tpu.memory_space<vmem>>, vector<8x256xf32>
    tpu.vector_store %arg10[%377, %c0_188], %376 {strides = array<i32>} : memref<8x256xf32, #tpu.memory_space<vmem>>, vector<8x256xf32>,
    %c1_i32 = arith.constant 1 : i32
    return
  }
  func.func @transform_0(%arg0: i32) -> (i32, i32) {
    %c0_i32 = arith.constant 0 : i32
    %c0_i32_0 = arith.constant 0 : i32
    %c0_i32_1 = arith.constant 0 : i32
    return %c0_i32, %c0_i32_0 : i32, i32
  }
  func.func @transform_1(%arg0: i32) -> (i32, i32) {
    %c0_i32 = arith.constant 0 : i32
    %c0_i32_0 = arith.constant 0 : i32
    %c0_i32_1 = arith.constant 0 : i32
    return %c0_i32, %c0_i32_0 : i32, i32
  }
  func.func @transform_2(%arg0: i32) -> (i32, i32) {
    %c0_i32 = arith.constant 0 : i32
    %c0_i32_0 = arith.constant 0 : i32
    %c0_i32_1 = arith.constant 0 : i32
    return %c0_i32, %c0_i32_0 : i32, i32
  }
  func.func @transform_3(%arg0: i32) -> (i32, i32) {
    %c0_i32 = arith.constant 0 : i32
    %c0_i32_0 = arith.constant 0 : i32
    %c0_i32_1 = arith.constant 0 : i32
    return %c0_i32, %c0_i32_0 : i32, i32
  }
  func.func @transform_4(%arg0: i32) -> (i32, i32) {
    %c0_i32 = arith.constant 0 : i32
    %c0_i32_0 = arith.constant 0 : i32
    %c0_i32_1 = arith.constant 0 : i32
    return %c0_i32, %c0_i32_0 : i32, i32
  }
  func.func @transform_5(%arg0: i32) -> (i32, i32) {
    %c0_i32 = arith.constant 0 : i32
    %c0_i32_0 = arith.constant 0 : i32
    %c0_i32_1 = arith.constant 0 : i32
    return %c0_i32, %c0_i32_0 : i32, i32
  }
  func.func @transform_6(%arg0: i32) -> (i32, i32) {
    %c0_i32 = arith.constant 0 : i32
    %c0_i32_0 = arith.constant 0 : i32
    %c0_i32_1 = arith.constant 0 : i32
    return %c0_i32, %c0_i32_0 : i32, i32
  }
  func.func @transform_7(%arg0: i32) -> (i32, i32) {
    %c0_i32 = arith.constant 0 : i32
    %c0_i32_0 = arith.constant 0 : i32
    %c0_i32_1 = arith.constant 0 : i32
    return %c0_i32, %c0_i32_0 : i32, i32
  }
  func.func @transform_8(%arg0: i32) -> (i32, i32) {
    %c0_i32 = arith.constant 0 : i32
    %c0_i32_0 = arith.constant 0 : i32
    return %arg0, %c0_i32 : i32, i32
  }
  func.func @transform_9(%arg0: i32) -> (i32, i32) {
    %c0_i32 = arith.constant 0 : i32
    %c0_i32_0 = arith.constant 0 : i32
    return %arg0, %c0_i32 : i32, i32
  }
}

</mosaic_0001>

<llo_original>
// kernel: neural_net_forward.1
$region0: #{neural_net_forward.1}
  #allocation0 [shape = 'u32[]', space=smem, size = 0x4, offset = 0x4, fixed_abs, tag = 'smem constant byte address 0x4 - core index']
  #allocation1 [shape = 'u32[144,128]{1,0:T(1,128)}', space=vmem, size = 0x12000, scoped, tag = 'internal scratch']
  #allocation2 [shape = 'f32[1,1]{1,0:T(1,128)S(6)}', space=smem, size = 0x200, scoped, tag = 'scoped memory for neural_net_forward.1']
  %s0 = inlined_call_operand.vmem [shape: f32[1,4], index: 0, kind: input, shape index: {}]
  %s1 = inlined_call_operand.vmem [shape: f32[1,4], index: 1, kind: input, shape index: {}]
  %s2 = inlined_call_operand.vmem [shape: f32[4,8], index: 2, kind: input, shape index: {}]
  %s3 = inlined_call_operand.vmem [shape: f32[1,8], index: 3, kind: input, shape index: {}]
  %s4 = inlined_call_operand.vmem [shape: f32[8,4], index: 4, kind: input, shape index: {}]
  %s5 = inlined_call_operand.vmem [shape: f32[1,4], index: 5, kind: input, shape index: {}]
  %s6 = inlined_call_operand.vmem [shape: f32[4,1], index: 6, kind: input, shape index: {}]
  %s7 = inlined_call_operand.<no memory space> [shape: f32[1,1], index: 7, kind: input, shape index: {}]
  %s8 = inlined_call_operand.vmem [shape: f32[8,256], index: 8, kind: input, shape index: {}]
  %s9 = inlined_call_operand.vmem [shape: f32[8,256], index: 9, kind: output, shape index: {}]
  %s10 = sld [smem:[#allocation0]]
  $region74: #{neural_net_forward.1} parent=0
    _
  %s12 = ssub.s32 1, %s10
  %s13 = scalar_select 0, %s12, %s10
  %14 = sst [smem:[#allocation2]] %s7
  $region1: #{neural_net_forward.1} parent=0
    #allocation3 [shape = 'u8[512]{0}', space=smem, size = 0x200, scoped, tag = 'input window, operand 0, single buffered']
    #allocation4 [shape = 's32[1]{0}', space=sflag, size = 0x4, scoped, tag = 'scoped memory for neural_net_forward.1']
    #allocation5 [shape = 'u8[512]{0}', space=smem, size = 0x200, scoped, tag = 'input window, operand 1, single buffered']
    #allocation6 [shape = 's32[1]{0}', space=sflag, size = 0x4, scoped, tag = 'scoped memory for neural_net_forward.1']
    #allocation7 [shape = 'u8[2048]{0}', space=smem, size = 0x800, scoped, tag = 'input window, operand 2, single buffered']
    #allocation8 [shape = 'u8[512]{0}', space=smem, size = 0x200, scoped, tag = 'input window, operand 3, single buffered']
    #allocation9 [shape = 's32[1]{0}', space=sflag, size = 0x4, scoped, tag = 'scoped memory for neural_net_forward.1']
    #allocation10 [shape = 'u8[4096]{0}', space=smem, size = 0x1000, scoped, tag = 'input window, operand 4, single buffered']
    #allocation11 [shape = 'u8[512]{0}', space=smem, size = 0x200, scoped, tag = 'input window, operand 5, single buffered']
    #allocation12 [shape = 's32[1]{0}', space=sflag, size = 0x4, scoped, tag = 'scoped memory for neural_net_forward.1']
    #allocation13 [shape = 'u8[2048]{0}', space=smem, size = 0x800, scoped, tag = 'input window, operand 6, single buffered']
    %15 = vsyncpa [#allocation4], 0
    %16 = vsyncpa [#allocation6], 0
    %17 = vsyncpa [#allocation9], 0
    %18 = vsyncpa [#allocation12], 0
    // Predicated region
    $region2: #{neural_net_forward.1} parent=1 // pred_check
      _
    $region3: #{neural_net_forward.1} parent=1 // pred_check_branch
      %20 = sbr.rel (0) target = $region5
    $region4: #{neural_net_forward.1} parent=1 // pred_region
      %s22 = ssub.s32 16, 16
      %23 = vsyncadd [#allocation4], %s22
      %s25 = sshll.u32 %s0, 4
      %s26 = int_to_ptr.vmem [resolvable:$true] %s25
      %28 = dma.vmem_to_smem %s26, 16, [#allocation3], [#allocation4]
    $region5: #{neural_net_forward.1} parent=1 // pred_fallthru
      _
    // Predicated region
    $region6: #{neural_net_forward.1} parent=1 // pred_check
      _
    $region7: #{neural_net_forward.1} parent=1 // pred_check_branch
      %30 = sbr.rel (0) target = $region9
    $region8: #{neural_net_forward.1} parent=1 // pred_region
      %s32 = ssub.s32 16, 16
      %33 = vsyncadd [#allocation6], %s32
      %s35 = sshll.u32 %s1, 4
      %s36 = int_to_ptr.vmem [resolvable:$true] %s35
      %38 = dma.vmem_to_smem %s36, 16, [#allocation5], [#allocation6]
    $region9: #{neural_net_forward.1} parent=1 // pred_fallthru
      _
    // Predicated region
    $region10: #{neural_net_forward.1} parent=1 // pred_check
      _
    $region11: #{neural_net_forward.1} parent=1 // pred_check_branch
      %40 = sbr.rel (0) target = $region13
    $region12: #{neural_net_forward.1} parent=1 // pred_region
      %s42 = ssub.s32 64, 64
      %43 = vsyncadd [#allocation6], %s42
      %s45 = sshll.u32 %s2, 4
      %s46 = int_to_ptr.vmem [resolvable:$true] %s45
      %48 = dma.vmem_to_smem %s46, 64, [#allocation7], [#allocation6]
    $region13: #{neural_net_forward.1} parent=1 // pred_fallthru
      _
    // Predicated region
    $region14: #{neural_net_forward.1} parent=1 // pred_check
      _
    $region15: #{neural_net_forward.1} parent=1 // pred_check_branch
      %50 = sbr.rel (0) target = $region17
    $region16: #{neural_net_forward.1} parent=1 // pred_region
      %s52 = ssub.s32 16, 16
      %53 = vsyncadd [#allocation9], %s52
      %s55 = sshll.u32 %s3, 4
      %s56 = int_to_ptr.vmem [resolvable:$true] %s55
      %58 = dma.vmem_to_smem %s56, 16, [#allocation8], [#allocation9]
    $region17: #{neural_net_forward.1} parent=1 // pred_fallthru
      _
    // Predicated region
    $region18: #{neural_net_forward.1} parent=1 // pred_check
      _
    $region19: #{neural_net_forward.1} parent=1 // pred_check_branch
      %60 = sbr.rel (0) target = $region21
    $region20: #{neural_net_forward.1} parent=1 // pred_region
      %s62 = ssub.s32 128, 128
      %63 = vsyncadd [#allocation9], %s62
      %s65 = sshll.u32 %s4, 4
      %s66 = int_to_ptr.vmem [resolvable:$true] %s65
      %68 = dma.vmem_to_smem %s66, 128, [#allocation10], [#allocation9]
    $region21: #{neural_net_forward.1} parent=1 // pred_fallthru
      _
    // Predicated region
    $region22: #{neural_net_forward.1} parent=1 // pred_check
      _
    $region23: #{neural_net_forward.1} parent=1 // pred_check_branch
      %70 = sbr.rel (0) target = $region25
    $region24: #{neural_net_forward.1} parent=1 // pred_region
      %s72 = ssub.s32 16, 16
      %73 = vsyncadd [#allocation12], %s72
      %s75 = sshll.u32 %s5, 4
      %s76 = int_to_ptr.vmem [resolvable:$true] %s75
      %78 = dma.vmem_to_smem %s76, 16, [#allocation11], [#allocation12]
    $region25: #{neural_net_forward.1} parent=1 // pred_fallthru
      _
    // Predicated region
    $region26: #{neural_net_forward.1} parent=1 // pred_check
      _
    $region27: #{neural_net_forward.1} parent=1 // pred_check_branch
      %80 = sbr.rel (0) target = $region29
    $region28: #{neural_net_forward.1} parent=1 // pred_region
      %s82 = ssub.s32 64, 64
      %83 = vsyncadd [#allocation12], %s82
      %s85 = sshll.u32 %s6, 4
      %s86 = int_to_ptr.vmem [resolvable:$true] %s85
      %88 = dma.vmem_to_smem %s86, 64, [#allocation13], [#allocation12]
    $region29: #{neural_net_forward.1} parent=1 // pred_fallthru
      _
    // Predicated region
    $region30: #{neural_net_forward.1} parent=1 // pred_check
      _
    $region31: #{neural_net_forward.1} parent=1 // pred_check_branch
      %90 = sbr.rel (0) target = $region33
    $region32: #{neural_net_forward.1} parent=1 // pred_region
      _
    $region33: #{neural_net_forward.1} parent=1 // pred_fallthru
      _
    // Predicated region
    $region34: #{neural_net_forward.1} parent=1 // pred_check
      _
    $region35: #{neural_net_forward.1} parent=1 // pred_check_branch
      %92 = sbr.rel (0) target = $region37
    $region36: #{neural_net_forward.1} parent=1 // pred_region
      _
    $region37: #{neural_net_forward.1} parent=1 // pred_fallthru
      _
    // Predicated region
    $region38: #{neural_net_forward.1} parent=1 // pred_check
      _
    $region39: #{neural_net_forward.1} parent=1 // pred_check_branch
      %94 = sbr.rel (0) target = $region41
    $region40: #{neural_net_forward.1} parent=1 // pred_region
      %95 = dma.done [#allocation4], 16
    $region41: #{neural_net_forward.1} parent=1 // pred_fallthru
      _
    // Predicated region
    $region42: #{neural_net_forward.1} parent=1 // pred_check
      _
    $region43: #{neural_net_forward.1} parent=1 // pred_check_branch
      %97 = sbr.rel (0) target = $region45
    $region44: #{neural_net_forward.1} parent=1 // pred_region
      %98 = dma.done [#allocation6], 16
    $region45: #{neural_net_forward.1} parent=1 // pred_fallthru
      _
    // Predicated region
    $region46: #{neural_net_forward.1} parent=1 // pred_check
      _
    $region47: #{neural_net_forward.1} parent=1 // pred_check_branch
      %100 = sbr.rel (0) target = $region49
    $region48: #{neural_net_forward.1} parent=1 // pred_region
      %101 = dma.done [#allocation6], 64
    $region49: #{neural_net_forward.1} parent=1 // pred_fallthru
      _
    // Predicated region
    $region50: #{neural_net_forward.1} parent=1 // pred_check
      _
    $region51: #{neural_net_forward.1} parent=1 // pred_check_branch
      %103 = sbr.rel (0) target = $region53
    $region52: #{neural_net_forward.1} parent=1 // pred_region
      %104 = dma.done [#allocation9], 16
    $region53: #{neural_net_forward.1} parent=1 // pred_fallthru
      _
    // Predicated region
    $region54: #{neural_net_forward.1} parent=1 // pred_check
      _
    $region55: #{neural_net_forward.1} parent=1 // pred_check_branch
      %106 = sbr.rel (0) target = $region57
    $region56: #{neural_net_forward.1} parent=1 // pred_region
      %107 = dma.done [#allocation9], 128
    $region57: #{neural_net_forward.1} parent=1 // pred_fallthru
      _
    // Predicated region
    $region58: #{neural_net_forward.1} parent=1 // pred_check
      _
    $region59: #{neural_net_forward.1} parent=1 // pred_check_branch
      %109 = sbr.rel (0) target = $region61
    $region60: #{neural_net_forward.1} parent=1 // pred_region
      %110 = dma.done [#allocation12], 16
    $region61: #{neural_net_forward.1} parent=1 // pred_fallthru
      _
    // Predicated region
    $region62: #{neural_net_forward.1} parent=1 // pred_check
      _
    $region63: #{neural_net_forward.1} parent=1 // pred_check_branch
      %112 = sbr.rel (0) target = $region65
    $region64: #{neural_net_forward.1} parent=1 // pred_region
      %113 = dma.done [#allocation12], 64
    $region65: #{neural_net_forward.1} parent=1 // pred_fallthru
      _
    %114 = sfence
    %s115 = sld [smem:[#allocation3]]
    %s116 = sld [smem:[#allocation3 + $0x1]]
    %s117 = sld [smem:[#allocation3 + $0x2]]
    %s118 = sld [smem:[#allocation3 + $0x3]]
    %s119 = sld [smem:[#allocation5]]
    %s120 = sld [smem:[#allocation5 + $0x1]]
    %s121 = sld [smem:[#allocation5 + $0x2]]
    %s122 = sld [smem:[#allocation5 + $0x3]]
    %s123 = sld [smem:[#allocation7]]
    %s124 = sld [smem:[#allocation7 + $0x1]]
    %s125 = sld [smem:[#allocation7 + $0x2]]
    %s126 = sld [smem:[#allocation7 + $0x3]]
    %s127 = sld [smem:[#allocation7 + $0x4]]
    %s128 = sld [smem:[#allocation7 + $0x5]]
    %s129 = sld [smem:[#allocation7 + $0x6]]
    %s130 = sld [smem:[#allocation7 + $0x7]]
    %s131 = sld [smem:[#allocation7 + $0x80]]
    %s132 = sld [smem:[#allocation7 + $0x81]]
    %s133 = sld [smem:[#allocation7 + $0x82]]
    %s134 = sld [smem:[#allocation7 + $0x83]]
    %s135 = sld [smem:[#allocation7 + $0x84]]
    %s136 = sld [smem:[#allocation7 + $0x85]]
    %s137 = sld [smem:[#allocation7 + $0x86]]
    %s138 = sld [smem:[#allocation7 + $0x87]]
    %s139 = sld [smem:[#allocation7 + $0x100]]
    %s140 = sld [smem:[#allocation7 + $0x101]]
    %s141 = sld [smem:[#allocation7 + $0x102]]
    %s142 = sld [smem:[#allocation7 + $0x103]]
    %s143 = sld [smem:[#allocation7 + $0x104]]
    %s144 = sld [smem:[#allocation7 + $0x105]]
    %s145 = sld [smem:[#allocation7 + $0x106]]
    %s146 = sld [smem:[#allocation7 + $0x107]]
    %s147 = sld [smem:[#allocation7 + $0x180]]
    %s148 = sld [smem:[#allocation7 + $0x181]]
    %s149 = sld [smem:[#allocation7 + $0x182]]
    %s150 = sld [smem:[#allocation7 + $0x183]]
    %s151 = sld [smem:[#allocation7 + $0x184]]
    %s152 = sld [smem:[#allocation7 + $0x185]]
    %s153 = sld [smem:[#allocation7 + $0x186]]
    %s154 = sld [smem:[#allocation7 + $0x187]]
    %s155 = sld [smem:[#allocation8]]
    %s156 = sld [smem:[#allocation8 + $0x1]]
    %s157 = sld [smem:[#allocation8 + $0x2]]
    %s158 = sld [smem:[#allocation8 + $0x3]]
    %s159 = sld [smem:[#allocation8 + $0x4]]
    %s160 = sld [smem:[#allocation8 + $0x5]]
    %s161 = sld [smem:[#allocation8 + $0x6]]
    %s162 = sld [smem:[#allocation8 + $0x7]]
    %s163 = sld [smem:[#allocation10]]
    %s164 = sld [smem:[#allocation10 + $0x1]]
    %s165 = sld [smem:[#allocation10 + $0x2]]
    %s166 = sld [smem:[#allocation10 + $0x3]]
    %s167 = sld [smem:[#allocation10 + $0x80]]
    %s168 = sld [smem:[#allocation10 + $0x81]]
    %s169 = sld [smem:[#allocation10 + $0x82]]
    %s170 = sld [smem:[#allocation10 + $0x83]]
    %s171 = sld [smem:[#allocation10 + $0x100]]
    %s172 = sld [smem:[#allocation10 + $0x101]]
    %s173 = sld [smem:[#allocation10 + $0x102]]
    %s174 = sld [smem:[#allocation10 + $0x103]]
    %s175 = sld [smem:[#allocation10 + $0x180]]
    %s176 = sld [smem:[#allocation10 + $0x181]]
    %s177 = sld [smem:[#allocation10 + $0x182]]
    %s178 = sld [smem:[#allocation10 + $0x183]]
    %s179 = sld [smem:[#allocation10 + $0x200]]
    %s180 = sld [smem:[#allocation10 + $0x201]]
    %s181 = sld [smem:[#allocation10 + $0x202]]
    %s182 = sld [smem:[#allocation10 + $0x203]]
    %s183 = sld [smem:[#allocation10 + $0x280]]
    %s184 = sld [smem:[#allocation10 + $0x281]]
    %s185 = sld [smem:[#allocation10 + $0x282]]
    %s186 = sld [smem:[#allocation10 + $0x283]]
    %s187 = sld [smem:[#allocation10 + $0x300]]
    %s188 = sld [smem:[#allocation10 + $0x301]]
    %s189 = sld [smem:[#allocation10 + $0x302]]
    %s190 = sld [smem:[#allocation10 + $0x303]]
    %s191 = sld [smem:[#allocation10 + $0x380]]
    %s192 = sld [smem:[#allocation10 + $0x381]]
    %s193 = sld [smem:[#allocation10 + $0x382]]
    %s194 = sld [smem:[#allocation10 + $0x383]]
    %s195 = sld [smem:[#allocation11]]
    %s196 = sld [smem:[#allocation11 + $0x1]]
    %s197 = sld [smem:[#allocation11 + $0x2]]
    %s198 = sld [smem:[#allocation11 + $0x3]]
    %s199 = sld [smem:[#allocation13]]
    %s200 = sld [smem:[#allocation13 + $0x80]]
    %s201 = sld [smem:[#allocation13 + $0x100]]
    %s202 = sld [smem:[#allocation13 + $0x180]]
    %s203 = sld [smem:[#allocation2]]
    %s204 = smul.u32 0, 2
    %s205 = smul.addr %s204, 8
    %s206 = scalar_lea.vmem %s8, %s205
    %v207 = vld [vmem:[%s206] sm:$0xff]
    %v208 = vld [vmem:[%s206 + $0x8] sm:$0xff]
    %v209 = vstv %s115
    %v210 = vmul.f32 %v207, %v209
    %v211 = vmul.f32 %v208, %v209
    %v212 = vstv %s119
    %v213 = vadd.f32 %v210, %v212
    %v214 = vadd.f32 %v211, %v212
    %v215 = vmax.f32 %v213, 0.0
    %v216 = vmax.f32 %v214, 0.0
    %v217 = vstv %s116
    %v218 = vmul.f32 %v207, %v217
    %v219 = vmul.f32 %v208, %v217
    %v220 = vstv %s120
    %v221 = vadd.f32 %v218, %v220
    %v222 = vadd.f32 %v219, %v220
    %v223 = vmax.f32 %v221, 0.0
    %v224 = vmax.f32 %v222, 0.0
    %v225 = vstv %s117
    %v226 = vmul.f32 %v207, %v225
    %v227 = vmul.f32 %v208, %v225
    %v228 = vstv %s121
    %v229 = vadd.f32 %v226, %v228
    %v230 = vadd.f32 %v227, %v228
    %v231 = vmax.f32 %v229, 0.0
    %v232 = vmax.f32 %v230, 0.0
    %v233 = vstv %s118
    %v234 = vmul.f32 %v207, %v233
    %v235 = vmul.f32 %v208, %v233
    %v236 = vstv %s122
    %v237 = vadd.f32 %v234, %v236
    %v238 = vadd.f32 %v235, %v236
    %v239 = vmax.f32 %v237, 0.0
    %v240 = vmax.f32 %v238, 0.0
    %v241 = vstv %s123
    %v242 = vmul.f32 %v215, %v241
    %v243 = vmul.f32 %v216, %v241
    %v244 = vstv %s155
    %v245 = vadd.f32 %v242, %v244
    %v246 = vadd.f32 %v243, %v244
    %v247 = vstv %s131
    %v248 = vmul.f32 %v223, %v247
    %v249 = vmul.f32 %v224, %v247
    %v250 = vadd.f32 %v245, %v248
    %v251 = vadd.f32 %v246, %v249
    %v252 = vstv %s139
    %v253 = vmul.f32 %v231, %v252
    %v254 = vmul.f32 %v232, %v252
    %v255 = vadd.f32 %v250, %v253
    %v256 = vadd.f32 %v251, %v254
    %v257 = vstv %s147
    %v258 = vmul.f32 %v239, %v257
    %v259 = vmul.f32 %v240, %v257
    %v260 = vadd.f32 %v255, %v258
    %v261 = vadd.f32 %v256, %v259
    %v262 = vtanh.pop %v260
    %v263 = vtanh.pop %v261
    %v264 = vstv %s124
    %v265 = vmul.f32 %v215, %v264
    %v266 = vmul.f32 %v216, %v264
    %v267 = vstv %s156
    %v268 = vadd.f32 %v265, %v267
    %v269 = vadd.f32 %v266, %v267
    %v270 = vstv %s132
    %v271 = vmul.f32 %v223, %v270
    %v272 = vmul.f32 %v224, %v270
    %v273 = vadd.f32 %v268, %v271
    %v274 = vadd.f32 %v269, %v272
    %v275 = vstv %s140
    %v276 = vmul.f32 %v231, %v275
    %v277 = vmul.f32 %v232, %v275
    %v278 = vadd.f32 %v273, %v276
    %v279 = vadd.f32 %v274, %v277
    %v280 = vstv %s148
    %v281 = vmul.f32 %v239, %v280
    %v282 = vmul.f32 %v240, %v280
    %v283 = vadd.f32 %v278, %v281
    %v284 = vadd.f32 %v279, %v282
    %v285 = vtanh.pop %v283
    %v286 = vtanh.pop %v284
    %v287 = vstv %s125
    %v288 = vmul.f32 %v215, %v287
    %v289 = vmul.f32 %v216, %v287
    %v290 = vstv %s157
    %v291 = vadd.f32 %v288, %v290
    %v292 = vadd.f32 %v289, %v290
    %v293 = vstv %s133
    %v294 = vmul.f32 %v223, %v293
    %v295 = vmul.f32 %v224, %v293
    %v296 = vadd.f32 %v291, %v294
    %v297 = vadd.f32 %v292, %v295
    %v298 = vstv %s141
    %v299 = vmul.f32 %v231, %v298
    %v300 = vmul.f32 %v232, %v298
    %v301 = vadd.f32 %v296, %v299
    %v302 = vadd.f32 %v297, %v300
    %v303 = vstv %s149
    %v304 = vmul.f32 %v239, %v303
    %v305 = vmul.f32 %v240, %v303
    %v306 = vadd.f32 %v301, %v304
    %v307 = vadd.f32 %v302, %v305
    %v308 = vtanh.pop %v306
    %v309 = vtanh.pop %v307
    %v310 = vstv %s126
    %v311 = vmul.f32 %v215, %v310
    %v312 = vmul.f32 %v216, %v310
    %v313 = vstv %s158
    %v314 = vadd.f32 %v311, %v313
    %v315 = vadd.f32 %v312, %v313
    %v316 = vstv %s134
    %v317 = vmul.f32 %v223, %v316
    %v318 = vmul.f32 %v224, %v316
    %v319 = vadd.f32 %v314, %v317
    %v320 = vadd.f32 %v315, %v318
    %v321 = vstv %s142
    %v322 = vmul.f32 %v231, %v321
    %v323 = vmul.f32 %v232, %v321
    %v324 = vadd.f32 %v319, %v322
    %v325 = vadd.f32 %v320, %v323
    %v326 = vstv %s150
    %v327 = vmul.f32 %v239, %v326
    %v328 = vmul.f32 %v240, %v326
    %v329 = vadd.f32 %v324, %v327
    %v330 = vadd.f32 %v325, %v328
    %v331 = vtanh.pop %v329
    %v332 = vtanh.pop %v330
    %v333 = vstv %s127
    %v334 = vmul.f32 %v215, %v333
    %v335 = vmul.f32 %v216, %v333
    %v336 = vstv %s159
    %v337 = vadd.f32 %v334, %v336
    %v338 = vadd.f32 %v335, %v336
    %v339 = vstv %s135
    %v340 = vmul.f32 %v223, %v339
    %v341 = vmul.f32 %v224, %v339
    %v342 = vadd.f32 %v337, %v340
    %v343 = vadd.f32 %v338, %v341
    %v344 = vstv %s143
    %v345 = vmul.f32 %v231, %v344
    %v346 = vmul.f32 %v232, %v344
    %v347 = vadd.f32 %v342, %v345
    %v348 = vadd.f32 %v343, %v346
    %v349 = vstv %s151
    %v350 = vmul.f32 %v239, %v349
    %v351 = vmul.f32 %v240, %v349
    %v352 = vadd.f32 %v347, %v350
    %v353 = vadd.f32 %v348, %v351
    %v354 = vtanh.pop %v352
    %v355 = vtanh.pop %v353
    %v356 = vstv %s128
    %v357 = vmul.f32 %v215, %v356
    %v358 = vmul.f32 %v216, %v356
    %v359 = vstv %s160
    %v360 = vadd.f32 %v357, %v359
    %v361 = vadd.f32 %v358, %v359
    %v362 = vstv %s136
    %v363 = vmul.f32 %v223, %v362
    %v364 = vmul.f32 %v224, %v362
    %v365 = vadd.f32 %v360, %v363
    %v366 = vadd.f32 %v361, %v364
    %v367 = vstv %s144
    %v368 = vmul.f32 %v231, %v367
    %v369 = vmul.f32 %v232, %v367
    %v370 = vadd.f32 %v365, %v368
    %v371 = vadd.f32 %v366, %v369
    %v372 = vstv %s152
    %v373 = vmul.f32 %v239, %v372
    %v374 = vmul.f32 %v240, %v372
    %v375 = vadd.f32 %v370, %v373
    %v376 = vadd.f32 %v371, %v374
    %v377 = vtanh.pop %v375
    %v378 = vtanh.pop %v376
    %v379 = vstv %s129
    %v380 = vmul.f32 %v215, %v379
    %v381 = vmul.f32 %v216, %v379
    %v382 = vstv %s161
    %v383 = vadd.f32 %v380, %v382
    %v384 = vadd.f32 %v381, %v382
    %v385 = vstv %s137
    %v386 = vmul.f32 %v223, %v385
    %v387 = vmul.f32 %v224, %v385
    %v388 = vadd.f32 %v383, %v386
    %v389 = vadd.f32 %v384, %v387
    %v390 = vstv %s145
    %v391 = vmul.f32 %v231, %v390
    %v392 = vmul.f32 %v232, %v390
    %v393 = vadd.f32 %v388, %v391
    %v394 = vadd.f32 %v389, %v392
    %v395 = vstv %s153
    %v396 = vmul.f32 %v239, %v395
    %v397 = vmul.f32 %v240, %v395
    %v398 = vadd.f32 %v393, %v396
    %v399 = vadd.f32 %v394, %v397
    %v400 = vtanh.pop %v398
    %v401 = vtanh.pop %v399
    %v402 = vstv %s130
    %v403 = vmul.f32 %v215, %v402
    %v404 = vmul.f32 %v216, %v402
    %v405 = vstv %s162
    %v406 = vadd.f32 %v403, %v405
    %v407 = vadd.f32 %v404, %v405
    %v408 = vstv %s138
    %v409 = vmul.f32 %v223, %v408
    %v410 = vmul.f32 %v224, %v408
    %v411 = vadd.f32 %v406, %v409
    %v412 = vadd.f32 %v407, %v410
    %v413 = vstv %s146
    %v414 = vmul.f32 %v231, %v413
    %v415 = vmul.f32 %v232, %v413
    %v416 = vadd.f32 %v411, %v414
    %v417 = vadd.f32 %v412, %v415
    %v418 = vstv %s154
    %v419 = vmul.f32 %v239, %v418
    %v420 = vmul.f32 %v240, %v418
    %v421 = vadd.f32 %v416, %v419
    %v422 = vadd.f32 %v417, %v420
    %v423 = vtanh.pop %v421
    %v424 = vtanh.pop %v422
    %v425 = vstv %s163
    %v426 = vmul.f32 %v262, %v425
    %v427 = vmul.f32 %v263, %v425
    %v428 = vstv %s195
    %v429 = vadd.f32 %v426, %v428
    %v430 = vadd.f32 %v427, %v428
    %v431 = vstv %s167
    %v432 = vmul.f32 %v285, %v431
    %v433 = vmul.f32 %v286, %v431
    %v434 = vadd.f32 %v429, %v432
    %v435 = vadd.f32 %v430, %v433
    %v436 = vstv %s171
    %v437 = vmul.f32 %v308, %v436
    %v438 = vmul.f32 %v309, %v436
    %v439 = vadd.f32 %v434, %v437
    %v440 = vadd.f32 %v435, %v438
    %v441 = vstv %s175
    %v442 = vmul.f32 %v331, %v441
    %v443 = vmul.f32 %v332, %v441
    %v444 = vadd.f32 %v439, %v442
    %v445 = vadd.f32 %v440, %v443
    %v446 = vstv %s179
    %v447 = vmul.f32 %v354, %v446
    %v448 = vmul.f32 %v355, %v446
    %v449 = vadd.f32 %v444, %v447
    %v450 = vadd.f32 %v445, %v448
    %v451 = vstv %s183
    %v452 = vmul.f32 %v377, %v451
    %v453 = vmul.f32 %v378, %v451
    %v454 = vadd.f32 %v449, %v452
    %v455 = vadd.f32 %v450, %v453
    %v456 = vstv %s187
    %v457 = vmul.f32 %v400, %v456
    %v458 = vmul.f32 %v401, %v456
    %v459 = vadd.f32 %v454, %v457
    %v460 = vadd.f32 %v455, %v458
    %v461 = vstv %s191
    %v462 = vmul.f32 %v423, %v461
    %v463 = vmul.f32 %v424, %v461
    %v464 = vadd.f32 %v459, %v462
    %v465 = vadd.f32 %v460, %v463
    %v466 = vmul.f32 %v464, 0.5
    %v467 = vmul.f32 %v465, 0.5
    %v468 = vtanh.pop %v466
    %v469 = vtanh.pop %v467
    %v470 = vmul.f32 %v468, 0.5
    %v471 = vmul.f32 %v469, 0.5
    %v472 = vadd.f32 %v470, 0.5
    %v473 = vadd.f32 %v471, 0.5
    %v474 = vstv %s164
    %v475 = vmul.f32 %v262, %v474
    %v476 = vmul.f32 %v263, %v474
    %v477 = vstv %s196
    %v478 = vadd.f32 %v475, %v477
    %v479 = vadd.f32 %v476, %v477
    %v480 = vstv %s168
    %v481 = vmul.f32 %v285, %v480
    %v482 = vmul.f32 %v286, %v480
    %v483 = vadd.f32 %v478, %v481
    %v484 = vadd.f32 %v479, %v482
    %v485 = vstv %s172
    %v486 = vmul.f32 %v308, %v485
    %v487 = vmul.f32 %v309, %v485
    %v488 = vadd.f32 %v483, %v486
    %v489 = vadd.f32 %v484, %v487
    %v490 = vstv %s176
    %v491 = vmul.f32 %v331, %v490
    %v492 = vmul.f32 %v332, %v490
    %v493 = vadd.f32 %v488, %v491
    %v494 = vadd.f32 %v489, %v492
    %v495 = vstv %s180
    %v496 = vmul.f32 %v354, %v495
    %v497 = vmul.f32 %v355, %v495
    %v498 = vadd.f32 %v493, %v496
    %v499 = vadd.f32 %v494, %v497
    %v500 = vstv %s184
    %v501 = vmul.f32 %v377, %v500
    %v502 = vmul.f32 %v378, %v500
    %v503 = vadd.f32 %v498, %v501
    %v504 = vadd.f32 %v499, %v502
    %v505 = vstv %s188
    %v506 = vmul.f32 %v400, %v505
    %v507 = vmul.f32 %v401, %v505
    %v508 = vadd.f32 %v503, %v506
    %v509 = vadd.f32 %v504, %v507
    %v510 = vstv %s192
    %v511 = vmul.f32 %v423, %v510
    %v512 = vmul.f32 %v424, %v510
    %v513 = vadd.f32 %v508, %v511
    %v514 = vadd.f32 %v509, %v512
    %v515 = vmul.f32 %v513, 0.5
    %v516 = vmul.f32 %v514, 0.5
    %v517 = vtanh.pop %v515
    %v518 = vtanh.pop %v516
    %v519 = vmul.f32 %v517, 0.5
    %v520 = vmul.f32 %v518, 0.5
    %v521 = vadd.f32 %v519, 0.5
    %v522 = vadd.f32 %v520, 0.5
    %v523 = vstv %s165
    %v524 = vmul.f32 %v262, %v523
    %v525 = vmul.f32 %v263, %v523
    %v526 = vstv %s197
    %v527 = vadd.f32 %v524, %v526
    %v528 = vadd.f32 %v525, %v526
    %v529 = vstv %s169
    %v530 = vmul.f32 %v285, %v529
    %v531 = vmul.f32 %v286, %v529
    %v532 = vadd.f32 %v527, %v530
    %v533 = vadd.f32 %v528, %v531
    %v534 = vstv %s173
    %v535 = vmul.f32 %v308, %v534
    %v536 = vmul.f32 %v309, %v534
    %v537 = vadd.f32 %v532, %v535
    %v538 = vadd.f32 %v533, %v536
    %v539 = vstv %s177
    %v540 = vmul.f32 %v331, %v539
    %v541 = vmul.f32 %v332, %v539
    %v542 = vadd.f32 %v537, %v540
    %v543 = vadd.f32 %v538, %v541
    %v544 = vstv %s181
    %v545 = vmul.f32 %v354, %v544
    %v546 = vmul.f32 %v355, %v544
    %v547 = vadd.f32 %v542, %v545
    %v548 = vadd.f32 %v543, %v546
    %v549 = vstv %s185
    %v550 = vmul.f32 %v377, %v549
    %v551 = vmul.f32 %v378, %v549
    %v552 = vadd.f32 %v547, %v550
    %v553 = vadd.f32 %v548, %v551
    %v554 = vstv %s189
    %v555 = vmul.f32 %v400, %v554
    %v556 = vmul.f32 %v401, %v554
    %v557 = vadd.f32 %v552, %v555
    %v558 = vadd.f32 %v553, %v556
    %v559 = vstv %s193
    %v560 = vmul.f32 %v423, %v559
    %v561 = vmul.f32 %v424, %v559
    %v562 = vadd.f32 %v557, %v560
    %v563 = vadd.f32 %v558, %v561
    %v564 = vmul.f32 %v562, 0.5
    %v565 = vmul.f32 %v563, 0.5
    %v566 = vtanh.pop %v564
    %v567 = vtanh.pop %v565
    %v568 = vmul.f32 %v566, 0.5
    %v569 = vmul.f32 %v567, 0.5
    %v570 = vadd.f32 %v568, 0.5
    %v571 = vadd.f32 %v569, 0.5
    %v572 = vstv %s166
    %v573 = vmul.f32 %v262, %v572
    %v574 = vmul.f32 %v263, %v572
    %v575 = vstv %s198
    %v576 = vadd.f32 %v573, %v575
    %v577 = vadd.f32 %v574, %v575
    %v578 = vstv %s170
    %v579 = vmul.f32 %v285, %v578
    %v580 = vmul.f32 %v286, %v578
    %v581 = vadd.f32 %v576, %v579
    %v582 = vadd.f32 %v577, %v580
    %v583 = vstv %s174
    %v584 = vmul.f32 %v308, %v583
    %v585 = vmul.f32 %v309, %v583
    %v586 = vadd.f32 %v581, %v584
    %v587 = vadd.f32 %v582, %v585
    %v588 = vstv %s178
    %v589 = vmul.f32 %v331, %v588
    %v590 = vmul.f32 %v332, %v588
    %v591 = vadd.f32 %v586, %v589
    %v592 = vadd.f32 %v587, %v590
    %v593 = vstv %s182
    %v594 = vmul.f32 %v354, %v593
    %v595 = vmul.f32 %v355, %v593
    %v596 = vadd.f32 %v591, %v594
    %v597 = vadd.f32 %v592, %v595
    %v598 = vstv %s186
    %v599 = vmul.f32 %v377, %v598
    %v600 = vmul.f32 %v378, %v598
    %v601 = vadd.f32 %v596, %v599
    %v602 = vadd.f32 %v597, %v600
    %v603 = vstv %s190
    %v604 = vmul.f32 %v400, %v603
    %v605 = vmul.f32 %v401, %v603
    %v606 = vadd.f32 %v601, %v604
    %v607 = vadd.f32 %v602, %v605
    %v608 = vstv %s194
    %v609 = vmul.f32 %v423, %v608
    %v610 = vmul.f32 %v424, %v608
    %v611 = vadd.f32 %v606, %v609
    %v612 = vadd.f32 %v607, %v610
    %v613 = vmul.f32 %v611, 0.5
    %v614 = vmul.f32 %v612, 0.5
    %v615 = vtanh.pop %v613
    %v616 = vtanh.pop %v614
    %v617 = vmul.f32 %v615, 0.5
    %v618 = vmul.f32 %v616, 0.5
    %v619 = vadd.f32 %v617, 0.5
    %v620 = vadd.f32 %v618, 0.5
    %v621 = vstv %s199
    %v622 = vmul.f32 %v472, %v621
    %v623 = vmul.f32 %v473, %v621
    %v624 = vstv %s203
    %v625 = vadd.f32 %v622, %v624
    %v626 = vadd.f32 %v623, %v624
    %v627 = vstv %s200
    %v628 = vmul.f32 %v521, %v627
    %v629 = vmul.f32 %v522, %v627
    %v630 = vadd.f32 %v625, %v628
    %v631 = vadd.f32 %v626, %v629
    %v632 = vstv %s201
    %v633 = vmul.f32 %v570, %v632
    %v634 = vmul.f32 %v571, %v632
    %v635 = vadd.f32 %v630, %v633
    %v636 = vadd.f32 %v631, %v634
    %v637 = vstv %s202
    %v638 = vmul.f32 %v619, %v637
    %v639 = vmul.f32 %v620, %v637
    %v640 = vadd.f32 %v635, %v638
    %v641 = vadd.f32 %v636, %v639
    %v642 = vmin.f32 %v640, 20.0
    %v643 = vmin.f32 %v641, 20.0
    %v644 = vmul.f32 %v642, 1.442695
    %v645 = vpow.pop %v644
    %v646 = vmul.f32 %v643, 1.442695
    %v647 = vpow.pop %v646
    %v648 = vadd.f32 %v645, 1.0
    %v649 = vlog2.pop %v648
    %v650 = vmul.f32 %v649, 0.6931472
    %v651 = vmul.f32 -0.5, %v645
    %v652 = vadd.f32 %v651, 1.0
    %v653 = vmul.f32 %v652, %v645
    %v654 = vand.u32 2147483647, %v645
    %vm655 = vcmp.lt.f32.partialorder %v654, 0.0004427343
    %v656 = vsel %vm655, %v653, %v650
    %v657 = vadd.f32 %v647, 1.0
    %v658 = vlog2.pop %v657
    %v659 = vmul.f32 %v658, 0.6931472
    %v660 = vmul.f32 -0.5, %v647
    %v661 = vadd.f32 %v660, 1.0
    %v662 = vmul.f32 %v661, %v647
    %v663 = vand.u32 2147483647, %v647
    %vm664 = vcmp.lt.f32.partialorder %v663, 0.0004427343
    %v665 = vsel %vm664, %v662, %v659
    %vm666 = vcmp.gt.f32.partialorder %v640, 20.0
    %vm667 = vcmp.gt.f32.partialorder %v641, 20.0
    %v668 = vsel %vm666, %v640, %v656
    %v669 = vsel %vm667, %v641, %v665
    %s670 = smul.addr %s204, 8
    %s671 = scalar_lea.vmem %s9, %s670
    %672 = vst [vmem:[%s671] sm:$0xff] %v668
    %673 = vst [vmem:[%s671 + $0x8] sm:$0xff] %v669
    // Predicated region
    $region66: #{neural_net_forward.1} parent=1 // pred_check
      _
    $region67: #{neural_net_forward.1} parent=1 // pred_check_branch
      %675 = sbr.rel (0) target = $region69
    $region68: #{neural_net_forward.1} parent=1 // pred_region
      _
    $region69: #{neural_net_forward.1} parent=1 // pred_fallthru
      _
    // Predicated region
    $region70: #{neural_net_forward.1} parent=1 // pred_check
      _
    $region71: #{neural_net_forward.1} parent=1 // pred_check_branch
      %677 = sbr.rel (0) target = $region73
    $region72: #{neural_net_forward.1} parent=1 // pred_region
      _
    $region73: #{neural_net_forward.1} parent=1 // pred_fallthru
      _
    %678 = vsyncpa [#allocation4], 1
    %679 = vsyncpa [#allocation6], 1
    %680 = vsyncpa [#allocation9], 1
    %681 = vsyncpa [#allocation12], 1

</llo_original>
